<compile_context>
chip_gen: v7x
topology: tpu7x:2x2x1
jax: 0.10.0
libtpu: 0.0.40
codegen_flags: <defaults>
</compile_context>

<pallas_src>
import math

import jax
import jax.numpy as jnp
from jax.experimental import pallas as pl
from jax.experimental.pallas import tpu as pltpu


def make_positional_encoding(model_dim: int, max_len: int = 5000,
                             dtype=jnp.float32) -> jnp.ndarray:
    """Same math as the PyTorch __init__; returns (1, max_len, model_dim).

    Build the table directly in the activation dtype so the forward pass never
    has to convert the whole max_len buffer.
    """
    position = jnp.arange(0, max_len, dtype=jnp.float32)[:, None]          # (max_len, 1)
    div_term = jnp.exp(
        jnp.arange(0, model_dim, 2, dtype=jnp.float32)
        * (-math.log(10000.0) / model_dim)
    )                                                                      # (model_dim//2,)
    angles = position * div_term                                           # (max_len, model_dim//2)
    pe = jnp.zeros((max_len, model_dim), dtype=jnp.float32)
    pe = pe.at[:, 0::2].set(jnp.sin(angles))
    pe = pe.at[:, 1::2].set(jnp.cos(angles))
    return pe[None, :, :].astype(dtype)                                    # (1, max_len, model_dim)


def _add_pe_kernel(x_ref, pe_ref, o_ref):
    # x_ref / o_ref: (Bb, TS, D_eff); pe_ref: (TS, D_eff) (leading dim squeezed).
    # The broadcast over the packed batch dim is free on the VPU (mem-bound add).
    o_ref[...] = x_ref[...] + pe_ref[...]


def _choose_fold(S: int, pe_len: int, D: int) -> int:
    """Largest fold f s.t. d_eff = f*D is a lane-dense multiple of 128 (<= 512),
    S % f == 0, pe_len % f == 0, and (S // f) % 8 == 0."""
    if D >= 128:
        return 1
    for d_eff in (512, 384, 256, 128):
        if d_eff % D:
            continue
        f = d_eff // D
        if f <= 1:
            continue
        if S % f == 0 and pe_len % f == 0 and (S // f) % 8 == 0:
            return f
    return 1


def positional_encoding_forward(x: jnp.ndarray, pe: jnp.ndarray,
                                *, tile_bytes: int = 4 * 1024 * 1024,
                                min_pallas_bytes: int = 128 * 1024,
                                donate_x: bool = False,
                                force_pallas: bool = False) -> jnp.ndarray:
    """x: (B, S, D); pe: (1, max_len, D) with max_len >= S.  Returns x + pe[:, :S, :].

    donate_x=True aliases x's HBM buffer to the output (input_output_aliases);
    only set it when the caller actually donates x at the jit boundary, otherwise
    XLA inserts a defensive copy and the alias is a net loss.
    """
    B, S, D = x.shape
    assert pe.shape[0] == 1 and pe.shape[2] == D and pe.shape[1] >= S

    if pe.dtype != x.dtype:
        # Slow path: prefer make_positional_encoding(dtype=x.dtype) at init so this
        # whole-max_len convert never runs in the forward pass.
        pe = pe.astype(x.dtype)

    itemsize = jnp.dtype(x.dtype).itemsize

    # Escape hatch: tiny problems are dominated by launch / pipeline fixed cost;
    # plain XLA fuses the add into neighboring ops for free.
    if not force_pallas and (S < 8 or B * S * D * itemsize < min_pallas_bytes):
        return x + pe[:, :S, :]

    # ---- layout: fold rows into the lane axis when D < 128 so stores are lane-dense.
    fold = _choose_fold(S, pe.shape[1], D)
    s_eff, d_eff = S // fold, D * fold
    x_eff = x.reshape(B, s_eff, d_eff)
    pe_eff = pe.reshape(1, pe.shape[1] // fold, d_eff)

    row_bytes = d_eff * itemsize

    # ---- tiling: whole (folded) sequence per block if it fits, packing extra
    #      batch elements on top; otherwise tile the sequence in multiples of 8.
    if s_eff % 8 == 0 and s_eff * row_bytes <= tile_bytes:
        ts = s_eff
        bb = int(max(1, min(B, tile_bytes // (ts * row_bytes))))
    else:
        ts = max(8, min(s_eff // 8 * 8, (tile_bytes // row_bytes) // 8 * 8))
        bb = 1

    grid_s = pl.cdiv(s_eff, ts)
    grid_b = pl.cdiv(B, bb)

    if grid_s >= 2:
        # Batch innermost: the PE tile's block index depends only on the S tile, so
        # its DMA is deduped across the grid_b consecutive inner iterations.  S axis
        # outer + "parallel" -> megacore shards on S and each core keeps the dedup.
        grid = (grid_s, grid_b)
        x_map = lambda s, b: (b, s, 0)
        pe_map = lambda s, b: (0, s, 0)
    else:
        # Degenerate case (single S tile): put batch on the outer (parallel) axis so
        # both v7x TensorCores get work; PE dedup is irrelevant with one S tile.
        grid = (grid_b, grid_s)
        x_map = lambda b, s: (b, s, 0)
        pe_map = lambda b, s: (0, s, 0)
    dims = ("parallel", "arbitrary")

    # VMEM budget: x + out blocks (bb, ts, d_eff) plus pe block (ts, d_eff),
    # double-buffered, plus headroom; clamp to v7x's 64 MiB physical VMEM.
    block_bytes = (2 * bb * ts + ts) * row_bytes
    vmem_limit = int(min(64 << 20, max(16 << 20, 2 * block_bytes + (4 << 20))))

    out_eff = pl.pallas_call(
        _add_pe_kernel,
        out_shape=jax.ShapeDtypeStruct((B, s_eff, d_eff), x.dtype),
        grid_spec=pltpu.PrefetchScalarGridSpec(
            num_scalar_prefetch=0,
            grid=grid,
            in_specs=[
                pl.BlockSpec((bb, ts, d_eff), x_map),      # x tile (batch packed)
                pl.BlockSpec((None, ts, d_eff), pe_map),   # pe tile, rows [0, S)
            ],
            out_specs=pl.BlockSpec((bb, ts, d_eff), x_map),
        ),
        compiler_params=pltpu.CompilerParams(
            dimension_semantics=dims,
            vmem_limit_bytes=vmem_limit,
        ),
        input_output_aliases={0: 0} if donate_x else {},
    )(x_eff, pe_eff)

    return out_eff.reshape(B, S, D)


if __name__ == "__main__":
    model_dim = 64
    batch, seq = 4, 256
    max_len = 512   # small buffer for the demo; semantics identical to max_len=5000

    pe = make_positional_encoding(model_dim, max_len=max_len, dtype=jnp.float32)

    key = jax.random.PRNGKey(0)
    k1, k2 = jax.random.split(key)

    # --- Pallas path (large enough to beat the escape-hatch threshold).
    x = jax.random.normal(k1, (batch, seq, model_dim), dtype=jnp.float32)
    ref = x + pe[:, :seq, :]
    out = jax.block_until_ready(positional_encoding_forward(x, pe))
    assert out.shape == (batch, seq, model_dim)
    assert jnp.allclose(out, ref, atol=1e-6), "mismatch vs reference (pallas path)"

    # --- Tiny-shape XLA escape hatch (original demo shape).
    x_small = jax.random.normal(k2, (2, 16, model_dim), dtype=jnp.float32)
    ref_small = x_small + pe[:, :16, :]
    out_small = jax.block_until_ready(positional_encoding_forward(x_small, pe))
    assert jnp.allclose(out_small, ref_small, atol=1e-6), "mismatch vs reference (xla path)"

    print("KERNEL_OK")
</pallas_src>

<mosaic_0001>
module attributes {stable_mosaic.version = 11 : i64} {
  func.func @_add_pe_kernel(%arg0: i32, %arg1: i32, %arg2: memref<4x32x512xf32, #tpu.memory_space<vmem>>, %arg3: memref<1x32x512xf32, #tpu.memory_space<vmem>>, %arg4: memref<4x32x512xf32, #tpu.memory_space<vmem>>) attributes {dimension_semantics = [#tpu.dimension_semantics<parallel>, #tpu.dimension_semantics<arbitrary>], iteration_bounds = array<i64: 1, 1>, scalar_prefetch = 0 : i64, scratch_operands = 0 : i64, tpu.core_type = #tpu.core_type<tc>, window_params = [{transform_indices = @transform_0, window_bounds = array<i64: 4, 32, 512>}, {transform_indices = @transform_1, window_bounds = array<i64: 1, 32, 512>}, {transform_indices = @transform_2, window_bounds = array<i64: 4, 32, 512>}]} {
    %c0 = arith.constant 0 : index
    %c0_0 = arith.constant 0 : index
    %c0_1 = arith.constant 0 : index
    %0 = vector.load %arg2[%c0, %c0_0, %c0_1] : memref<4x32x512xf32, #tpu.memory_space<vmem>>, vector<4x32x512xf32>
    %c0_2 = arith.constant 0 : index
    %c0_3 = arith.constant 0 : index
    %c0_4 = arith.constant 0 : index
    %1 = vector.load %arg3[%c0_2, %c0_3, %c0_4] : memref<1x32x512xf32, #tpu.memory_space<vmem>>, vector<1x32x512xf32>
    %2 = vector.shape_cast %1 : vector<1x32x512xf32> to vector<32x512xf32>
    %3 = vector.shape_cast %2 : vector<32x512xf32> to vector<1x32x512xf32>
    %4 = vector.broadcast %3 : vector<1x32x512xf32> to vector<4x32x512xf32>
    %5 = arith.addf %0, %4 : vector<4x32x512xf32>
    %c0_5 = arith.constant 0 : index
    %c0_6 = arith.constant 0 : index
    %c0_7 = arith.constant 0 : index
    %6 = vector.load %arg4[%c0_5, %c0_6, %c0_7] : memref<4x32x512xf32, #tpu.memory_space<vmem>>, vector<4x32x512xf32>
    tpu.vector_store %arg4[%c0_5, %c0_6, %c0_7], %5 {strides = array<i32>} : memref<4x32x512xf32, #tpu.memory_space<vmem>>, vector<4x32x512xf32>,
    return
  }
  func.func @transform_0(%arg0: i32, %arg1: i32) -> (i32, i32, i32) {
    %c0_i32 = arith.constant 0 : i32
    %c0_i32_0 = arith.constant 0 : i32
    return %arg0, %arg1, %c0_i32 : i32, i32, i32
  }
  func.func @transform_1(%arg0: i32, %arg1: i32) -> (i32, i32, i32) {
    %c0_i32 = arith.constant 0 : i32
    %c0_i32_0 = arith.constant 0 : i32
    %c0_i32_1 = arith.constant 0 : i32
    return %c0_i32, %arg1, %c0_i32_0 : i32, i32, i32
  }
  func.func @transform_2(%arg0: i32, %arg1: i32) -> (i32, i32, i32) {
    %c0_i32 = arith.constant 0 : i32
    %c0_i32_0 = arith.constant 0 : i32
    return %arg0, %arg1, %c0_i32 : i32, i32, i32
  }
}

</mosaic_0001>

<llo_original>
// kernel: tpu_custom_call.1
$region0: #{tpu_custom_call.1}
  #allocation0 [shape = 'u32[]', space=smem, size = 0x4, offset = 0x4, fixed_abs, tag = 'smem constant byte address 0x4 - core index']
  #allocation1 [shape = 'u32[144,128]{1,0:T(1,128)}', space=vmem, size = 0x12000, scoped, tag = 'internal scratch']
  %s0 = inlined_call_operand.hbm [shape: f32[4,32,512], index: 0, kind: input, shape index: {}]
  %s1 = inlined_call_operand.hbm [shape: f32[1,64,512], index: 1, kind: input, shape index: {}]
  %s2 = inlined_call_operand.hbm [shape: f32[4,32,512], index: 2, kind: output, shape index: {}]
  %s3 = sld [smem:[#allocation0]]
  $region26: #{tpu_custom_call.1} parent=0
    _
  %s5 = ssub.s32 1, %s3
  %s6 = scalar_select 0, %s5, %s3
  $region1: #{tpu_custom_call.1} parent=0
    #allocation2 [shape = 'u8[262144]{0}', space=vmem, size = 0x40000, scoped, tag = 'input window, operand 0, single buffered']
    #allocation3 [shape = 's32[1]{0}', space=sflag, size = 0x4, scoped, tag = 'scoped memory for tpu_custom_call.1']
    #allocation4 [shape = 's32[1]{0}', space=sflag, size = 0x4, scoped, tag = 'scoped memory for tpu_custom_call.1']
    #allocation5 [shape = 'u8[65536]{0}', space=vmem, size = 0x10000, scoped, tag = 'input window, operand 1, single buffered']
    #allocation6 [shape = 's32[1]{0}', space=sflag, size = 0x4, scoped, tag = 'scoped memory for tpu_custom_call.1']
    #allocation7 [shape = 'u8[262144]{0}', space=vmem, size = 0x40000, scoped, tag = 'output window, operand 0, single buffered']
    %7 = vsyncpa [#allocation3], 0
    %8 = vsyncpa [#allocation6], 0
    %9 = vsyncpa [#allocation4], 0
    // Predicated region
    $region2: #{tpu_custom_call.1} parent=1 // pred_check
      _
    $region3: #{tpu_custom_call.1} parent=1 // pred_check_branch
      %11 = sbr.rel (0) target = $region5
    $region4: #{tpu_custom_call.1} parent=1 // pred_region
      %s13 = ssub.s32 8192, 8192
      %14 = vsyncadd [#allocation3], %s13
      %s15 = sshll.u32 [#allocation2], 4
      %s16 = int_to_ptr.vmem [resolvable:$true] %s15
      %21 = dma.hbm_to_vmem [thread:$0]  %s0, 8192, %s16, [#allocation3], 512, 512, 32
    $region5: #{tpu_custom_call.1} parent=1 // pred_fallthru
      _
    // Predicated region
    $region6: #{tpu_custom_call.1} parent=1 // pred_check
      _
    $region7: #{tpu_custom_call.1} parent=1 // pred_check_branch
      %23 = sbr.rel (0) target = $region9
    $region8: #{tpu_custom_call.1} parent=1 // pred_region
      %s25 = ssub.s32 2048, 2048
      %26 = vsyncadd [#allocation6], %s25
      %s27 = sshll.u32 [#allocation5], 4
      %s28 = int_to_ptr.vmem [resolvable:$true] %s27
      %33 = dma.hbm_to_vmem [thread:$0]  %s1, 2048, %s28, [#allocation6], 512, 512, 32
    $region9: #{tpu_custom_call.1} parent=1 // pred_fallthru
      _
    // Predicated region
    $region10: #{tpu_custom_call.1} parent=1 // pred_check
      _
    $region11: #{tpu_custom_call.1} parent=1 // pred_check_branch
      %35 = sbr.rel (0) target = $region13
    $region12: #{tpu_custom_call.1} parent=1 // pred_region
      %36 = dma.done [#allocation3], 8192
    $region13: #{tpu_custom_call.1} parent=1 // pred_fallthru
      _
    // Predicated region
    $region14: #{tpu_custom_call.1} parent=1 // pred_check
      _
    $region15: #{tpu_custom_call.1} parent=1 // pred_check_branch
      %38 = sbr.rel (0) target = $region17
    $region16: #{tpu_custom_call.1} parent=1 // pred_region
      %39 = dma.done [#allocation6], 2048
    $region17: #{tpu_custom_call.1} parent=1 // pred_fallthru
      _
    %v40 = vld [vmem:[#allocation2] sm:$0xff]
    %v41 = vld [vmem:[#allocation2 + $0x8] sm:$0xff]
    %v42 = vld [vmem:[#allocation2 + $0x10] sm:$0xff]
    %v43 = vld [vmem:[#allocation2 + $0x18] sm:$0xff]
    %v44 = vld [vmem:[#allocation2 + $0x20] sm:$0xff]
    %v45 = vld [vmem:[#allocation2 + $0x28] sm:$0xff]
    %v46 = vld [vmem:[#allocation2 + $0x30] sm:$0xff]
    %v47 = vld [vmem:[#allocation2 + $0x38] sm:$0xff]
    %v48 = vld [vmem:[#allocation2 + $0x40] sm:$0xff]
    %v49 = vld [vmem:[#allocation2 + $0x48] sm:$0xff]
    %v50 = vld [vmem:[#allocation2 + $0x50] sm:$0xff]
    %v51 = vld [vmem:[#allocation2 + $0x58] sm:$0xff]
    %v52 = vld [vmem:[#allocation2 + $0x60] sm:$0xff]
    %v53 = vld [vmem:[#allocation2 + $0x68] sm:$0xff]
    %v54 = vld [vmem:[#allocation2 + $0x70] sm:$0xff]
    %v55 = vld [vmem:[#allocation2 + $0x78] sm:$0xff]
    %v56 = vld [vmem:[#allocation2 + $0x80] sm:$0xff]
    %v57 = vld [vmem:[#allocation2 + $0x88] sm:$0xff]
    %v58 = vld [vmem:[#allocation2 + $0x90] sm:$0xff]
    %v59 = vld [vmem:[#allocation2 + $0x98] sm:$0xff]
    %v60 = vld [vmem:[#allocation2 + $0xa0] sm:$0xff]
    %v61 = vld [vmem:[#allocation2 + $0xa8] sm:$0xff]
    %v62 = vld [vmem:[#allocation2 + $0xb0] sm:$0xff]
    %v63 = vld [vmem:[#allocation2 + $0xb8] sm:$0xff]
    %v64 = vld [vmem:[#allocation2 + $0xc0] sm:$0xff]
    %v65 = vld [vmem:[#allocation2 + $0xc8] sm:$0xff]
    %v66 = vld [vmem:[#allocation2 + $0xd0] sm:$0xff]
    %v67 = vld [vmem:[#allocation2 + $0xd8] sm:$0xff]
    %v68 = vld [vmem:[#allocation2 + $0xe0] sm:$0xff]
    %v69 = vld [vmem:[#allocation2 + $0xe8] sm:$0xff]
    %v70 = vld [vmem:[#allocation2 + $0xf0] sm:$0xff]
    %v71 = vld [vmem:[#allocation2 + $0xf8] sm:$0xff]
    %v72 = vld [vmem:[#allocation2 + $0x100] sm:$0xff]
    %v73 = vld [vmem:[#allocation2 + $0x108] sm:$0xff]
    %v74 = vld [vmem:[#allocation2 + $0x110] sm:$0xff]
    %v75 = vld [vmem:[#allocation2 + $0x118] sm:$0xff]
    %v76 = vld [vmem:[#allocation2 + $0x120] sm:$0xff]
    %v77 = vld [vmem:[#allocation2 + $0x128] sm:$0xff]
    %v78 = vld [vmem:[#allocation2 + $0x130] sm:$0xff]
    %v79 = vld [vmem:[#allocation2 + $0x138] sm:$0xff]
    %v80 = vld [vmem:[#allocation2 + $0x140] sm:$0xff]
    %v81 = vld [vmem:[#allocation2 + $0x148] sm:$0xff]
    %v82 = vld [vmem:[#allocation2 + $0x150] sm:$0xff]
    %v83 = vld [vmem:[#allocation2 + $0x158] sm:$0xff]
    %v84 = vld [vmem:[#allocation2 + $0x160] sm:$0xff]
    %v85 = vld [vmem:[#allocation2 + $0x168] sm:$0xff]
    %v86 = vld [vmem:[#allocation2 + $0x170] sm:$0xff]
    %v87 = vld [vmem:[#allocation2 + $0x178] sm:$0xff]
    %v88 = vld [vmem:[#allocation2 + $0x180] sm:$0xff]
    %v89 = vld [vmem:[#allocation2 + $0x188] sm:$0xff]
    %v90 = vld [vmem:[#allocation2 + $0x190] sm:$0xff]
    %v91 = vld [vmem:[#allocation2 + $0x198] sm:$0xff]
    %v92 = vld [vmem:[#allocation2 + $0x1a0] sm:$0xff]
    %v93 = vld [vmem:[#allocation2 + $0x1a8] sm:$0xff]
    %v94 = vld [vmem:[#allocation2 + $0x1b0] sm:$0xff]
    %v95 = vld [vmem:[#allocation2 + $0x1b8] sm:$0xff]
    %v96 = vld [vmem:[#allocation2 + $0x1c0] sm:$0xff]
    %v97 = vld [vmem:[#allocation2 + $0x1c8] sm:$0xff]
    %v98 = vld [vmem:[#allocation2 + $0x1d0] sm:$0xff]
    %v99 = vld [vmem:[#allocation2 + $0x1d8] sm:$0xff]
    %v100 = vld [vmem:[#allocation2 + $0x1e0] sm:$0xff]
    %v101 = vld [vmem:[#allocation2 + $0x1e8] sm:$0xff]
    %v102 = vld [vmem:[#allocation2 + $0x1f0] sm:$0xff]
    %v103 = vld [vmem:[#allocation2 + $0x1f8] sm:$0xff]
    %v104 = vld [vmem:[#allocation5] sm:$0xff]
    %v105 = vld [vmem:[#allocation5 + $0x8] sm:$0xff]
    %v106 = vld [vmem:[#allocation5 + $0x10] sm:$0xff]
    %v107 = vld [vmem:[#allocation5 + $0x18] sm:$0xff]
    %v108 = vld [vmem:[#allocation5 + $0x20] sm:$0xff]
    %v109 = vld [vmem:[#allocation5 + $0x28] sm:$0xff]
    %v110 = vld [vmem:[#allocation5 + $0x30] sm:$0xff]
    %v111 = vld [vmem:[#allocation5 + $0x38] sm:$0xff]
    %v112 = vld [vmem:[#allocation5 + $0x40] sm:$0xff]
    %v113 = vld [vmem:[#allocation5 + $0x48] sm:$0xff]
    %v114 = vld [vmem:[#allocation5 + $0x50] sm:$0xff]
    %v115 = vld [vmem:[#allocation5 + $0x58] sm:$0xff]
    %v116 = vld [vmem:[#allocation5 + $0x60] sm:$0xff]
    %v117 = vld [vmem:[#allocation5 + $0x68] sm:$0xff]
    %v118 = vld [vmem:[#allocation5 + $0x70] sm:$0xff]
    %v119 = vld [vmem:[#allocation5 + $0x78] sm:$0xff]
    %v120 = vadd.f32 %v40, %v104
    %v121 = vadd.f32 %v41, %v105
    %v122 = vadd.f32 %v42, %v106
    %v123 = vadd.f32 %v43, %v107
    %v124 = vadd.f32 %v44, %v108
    %v125 = vadd.f32 %v45, %v109
    %v126 = vadd.f32 %v46, %v110
    %v127 = vadd.f32 %v47, %v111
    %v128 = vadd.f32 %v48, %v112
    %v129 = vadd.f32 %v49, %v113
    %v130 = vadd.f32 %v50, %v114
    %v131 = vadd.f32 %v51, %v115
    %v132 = vadd.f32 %v52, %v116
    %v133 = vadd.f32 %v53, %v117
    %v134 = vadd.f32 %v54, %v118
    %v135 = vadd.f32 %v55, %v119
    %v136 = vadd.f32 %v56, %v104
    %v137 = vadd.f32 %v57, %v105
    %v138 = vadd.f32 %v58, %v106
    %v139 = vadd.f32 %v59, %v107
    %v140 = vadd.f32 %v60, %v108
    %v141 = vadd.f32 %v61, %v109
    %v142 = vadd.f32 %v62, %v110
    %v143 = vadd.f32 %v63, %v111
    %v144 = vadd.f32 %v64, %v112
    %v145 = vadd.f32 %v65, %v113
    %v146 = vadd.f32 %v66, %v114
    %v147 = vadd.f32 %v67, %v115
    %v148 = vadd.f32 %v68, %v116
    %v149 = vadd.f32 %v69, %v117
    %v150 = vadd.f32 %v70, %v118
    %v151 = vadd.f32 %v71, %v119
    %v152 = vadd.f32 %v72, %v104
    %v153 = vadd.f32 %v73, %v105
    %v154 = vadd.f32 %v74, %v106
    %v155 = vadd.f32 %v75, %v107
    %v156 = vadd.f32 %v76, %v108
    %v157 = vadd.f32 %v77, %v109
    %v158 = vadd.f32 %v78, %v110
    %v159 = vadd.f32 %v79, %v111
    %v160 = vadd.f32 %v80, %v112
    %v161 = vadd.f32 %v81, %v113
    %v162 = vadd.f32 %v82, %v114
    %v163 = vadd.f32 %v83, %v115
    %v164 = vadd.f32 %v84, %v116
    %v165 = vadd.f32 %v85, %v117
    %v166 = vadd.f32 %v86, %v118
    %v167 = vadd.f32 %v87, %v119
    %v168 = vadd.f32 %v88, %v104
    %v169 = vadd.f32 %v89, %v105
    %v170 = vadd.f32 %v90, %v106
    %v171 = vadd.f32 %v91, %v107
    %v172 = vadd.f32 %v92, %v108
    %v173 = vadd.f32 %v93, %v109
    %v174 = vadd.f32 %v94, %v110
    %v175 = vadd.f32 %v95, %v111
    %v176 = vadd.f32 %v96, %v112
    %v177 = vadd.f32 %v97, %v113
    %v178 = vadd.f32 %v98, %v114
    %v179 = vadd.f32 %v99, %v115
    %v180 = vadd.f32 %v100, %v116
    %v181 = vadd.f32 %v101, %v117
    %v182 = vadd.f32 %v102, %v118
    %v183 = vadd.f32 %v103, %v119
    %184 = vst [vmem:[#allocation7] sm:$0xff] %v120
    %185 = vst [vmem:[#allocation7 + $0x8] sm:$0xff] %v121
    %186 = vst [vmem:[#allocation7 + $0x10] sm:$0xff] %v122
    %187 = vst [vmem:[#allocation7 + $0x18] sm:$0xff] %v123
    %188 = vst [vmem:[#allocation7 + $0x20] sm:$0xff] %v124
    %189 = vst [vmem:[#allocation7 + $0x28] sm:$0xff] %v125
    %190 = vst [vmem:[#allocation7 + $0x30] sm:$0xff] %v126
    %191 = vst [vmem:[#allocation7 + $0x38] sm:$0xff] %v127
    %192 = vst [vmem:[#allocation7 + $0x40] sm:$0xff] %v128
    %193 = vst [vmem:[#allocation7 + $0x48] sm:$0xff] %v129
    %194 = vst [vmem:[#allocation7 + $0x50] sm:$0xff] %v130
    %195 = vst [vmem:[#allocation7 + $0x58] sm:$0xff] %v131
    %196 = vst [vmem:[#allocation7 + $0x60] sm:$0xff] %v132
    %197 = vst [vmem:[#allocation7 + $0x68] sm:$0xff] %v133
    %198 = vst [vmem:[#allocation7 + $0x70] sm:$0xff] %v134
    %199 = vst [vmem:[#allocation7 + $0x78] sm:$0xff] %v135
    %200 = vst [vmem:[#allocation7 + $0x80] sm:$0xff] %v136
    %201 = vst [vmem:[#allocation7 + $0x88] sm:$0xff] %v137
    %202 = vst [vmem:[#allocation7 + $0x90] sm:$0xff] %v138
    %203 = vst [vmem:[#allocation7 + $0x98] sm:$0xff] %v139
    %204 = vst [vmem:[#allocation7 + $0xa0] sm:$0xff] %v140
    %205 = vst [vmem:[#allocation7 + $0xa8] sm:$0xff] %v141
    %206 = vst [vmem:[#allocation7 + $0xb0] sm:$0xff] %v142
    %207 = vst [vmem:[#allocation7 + $0xb8] sm:$0xff] %v143
    %208 = vst [vmem:[#allocation7 + $0xc0] sm:$0xff] %v144
    %209 = vst [vmem:[#allocation7 + $0xc8] sm:$0xff] %v145
    %210 = vst [vmem:[#allocation7 + $0xd0] sm:$0xff] %v146
    %211 = vst [vmem:[#allocation7 + $0xd8] sm:$0xff] %v147
    %212 = vst [vmem:[#allocation7 + $0xe0] sm:$0xff] %v148
    %213 = vst [vmem:[#allocation7 + $0xe8] sm:$0xff] %v149
    %214 = vst [vmem:[#allocation7 + $0xf0] sm:$0xff] %v150
    %215 = vst [vmem:[#allocation7 + $0xf8] sm:$0xff] %v151
    %216 = vst [vmem:[#allocation7 + $0x100] sm:$0xff] %v152
    %217 = vst [vmem:[#allocation7 + $0x108] sm:$0xff] %v153
    %218 = vst [vmem:[#allocation7 + $0x110] sm:$0xff] %v154
    %219 = vst [vmem:[#allocation7 + $0x118] sm:$0xff] %v155
    %220 = vst [vmem:[#allocation7 + $0x120] sm:$0xff] %v156
    %221 = vst [vmem:[#allocation7 + $0x128] sm:$0xff] %v157
    %222 = vst [vmem:[#allocation7 + $0x130] sm:$0xff] %v158
    %223 = vst [vmem:[#allocation7 + $0x138] sm:$0xff] %v159
    %224 = vst [vmem:[#allocation7 + $0x140] sm:$0xff] %v160
    %225 = vst [vmem:[#allocation7 + $0x148] sm:$0xff] %v161
    %226 = vst [vmem:[#allocation7 + $0x150] sm:$0xff] %v162
    %227 = vst [vmem:[#allocation7 + $0x158] sm:$0xff] %v163
    %228 = vst [vmem:[#allocation7 + $0x160] sm:$0xff] %v164
    %229 = vst [vmem:[#allocation7 + $0x168] sm:$0xff] %v165
    %230 = vst [vmem:[#allocation7 + $0x170] sm:$0xff] %v166
    %231 = vst [vmem:[#allocation7 + $0x178] sm:$0xff] %v167
    %232 = vst [vmem:[#allocation7 + $0x180] sm:$0xff] %v168
    %233 = vst [vmem:[#allocation7 + $0x188] sm:$0xff] %v169
    %234 = vst [vmem:[#allocation7 + $0x190] sm:$0xff] %v170
    %235 = vst [vmem:[#allocation7 + $0x198] sm:$0xff] %v171
    %236 = vst [vmem:[#allocation7 + $0x1a0] sm:$0xff] %v172
    %237 = vst [vmem:[#allocation7 + $0x1a8] sm:$0xff] %v173
    %238 = vst [vmem:[#allocation7 + $0x1b0] sm:$0xff] %v174
    %239 = vst [vmem:[#allocation7 + $0x1b8] sm:$0xff] %v175
    %240 = vst [vmem:[#allocation7 + $0x1c0] sm:$0xff] %v176
    %241 = vst [vmem:[#allocation7 + $0x1c8] sm:$0xff] %v177
    %242 = vst [vmem:[#allocation7 + $0x1d0] sm:$0xff] %v178
    %243 = vst [vmem:[#allocation7 + $0x1d8] sm:$0xff] %v179
    %244 = vst [vmem:[#allocation7 + $0x1e0] sm:$0xff] %v180
    %245 = vst [vmem:[#allocation7 + $0x1e8] sm:$0xff] %v181
    %246 = vst [vmem:[#allocation7 + $0x1f0] sm:$0xff] %v182
    %247 = vst [vmem:[#allocation7 + $0x1f8] sm:$0xff] %v183
    // Predicated region
    $region18: #{tpu_custom_call.1} parent=1 // pred_check
      _
    $region19: #{tpu_custom_call.1} parent=1 // pred_check_branch
      %249 = sbr.rel (0) target = $region21
    $region20: #{tpu_custom_call.1} parent=1 // pred_region
      %s251 = ssub.s32 8192, 8192
      %252 = vsyncadd [#allocation4], %s251
      %s253 = sshll.u32 [#allocation7], 4
      %s254 = int_to_ptr.vmem [resolvable:$true] %s253
      %259 = dma.vmem_to_hbm [thread:$0]  %s254, 8192, %s2, [#allocation4], 512, 512, 32
    $region21: #{tpu_custom_call.1} parent=1 // pred_fallthru
      _
    // Predicated region
    $region22: #{tpu_custom_call.1} parent=1 // pred_check
      _
    $region23: #{tpu_custom_call.1} parent=1 // pred_check_branch
      %261 = sbr.rel (0) target = $region25
    $region24: #{tpu_custom_call.1} parent=1 // pred_region
      %262 = dma.done [#allocation4], 8192
    $region25: #{tpu_custom_call.1} parent=1 // pred_fallthru
      _
    %263 = vsyncpa [#allocation3], 1
    %264 = vsyncpa [#allocation6], 1
    %265 = vsyncpa [#allocation4], 1

</llo_original>
